<compile_context>
chip_gen: v6e
topology: v6e:2x2x1
jax: 0.10.0
libtpu: 0.0.40
codegen_flags: <defaults>
</compile_context>

<pallas_src>
import functools

import jax
import jax.numpy as jnp
from jax.experimental import pallas as pl
from jax.experimental.pallas import tpu as pltpu


def _round_up(x, m):
    return ((x + m - 1) // m) * m


def _critic_kernel(s_ref, a_ref,
                   w1s_ref, w1a_ref, b1_ref,
                   w2_ref, b2_ref, w5_ref, b5_ref,
                   w3a_ref, w3b_ref, b3_ref,
                   q_ref, *, hidden):
    """One batch tile of the TD3 twin-critic forward pass."""
    cdt = w2_ref.dtype                       # matmul compute dtype (bf16 / f32)

    s = s_ref[...].astype(cdt)
    a = a_ref[...].astype(cdt)

    # Fused first layer of BOTH heads; concat(state, action) fused via the
    # split weights (state part / action part).  -> [tile_b, 2*hidden] in f32.
    h = (jnp.dot(s, w1s_ref[...], preferred_element_type=jnp.float32)
         + jnp.dot(a, w1a_ref[...], preferred_element_type=jnp.float32)
         + b1_ref[...])
    h = jnp.maximum(h, 0.0)                  # f32 elementwise

    h1 = h[:, :hidden]                       # head-1 activations (lane-aligned)
    h2 = h[:, hidden:]                       # head-2 activations

    g1 = jnp.dot(h1.astype(cdt), w2_ref[...],
                 preferred_element_type=jnp.float32) + b2_ref[...]
    g1 = jnp.maximum(g1, 0.0)
    g2 = jnp.dot(h2.astype(cdt), w5_ref[...],
                 preferred_element_type=jnp.float32) + b5_ref[...]
    g2 = jnp.maximum(g2, 0.0)

    # Fused final layer: block-diagonal halves of a [2*hidden, 2] weight.
    # Produces a single lane-packed [tile_b, 2] output (q1 | q2).
    q = (jnp.dot(g1.astype(cdt), w3a_ref[...], preferred_element_type=jnp.float32)
         + jnp.dot(g2.astype(cdt), w3b_ref[...], preferred_element_type=jnp.float32)
         + b3_ref[...])
    q_ref[...] = q.astype(q_ref.dtype)


def fuse_critic_params(params, state_dim, compute_dtype=jnp.bfloat16):
    """Fuse the two Q-heads' layer-1 / layer-3 weights and cast matmul weights."""
    H = params["w2"].shape[0]
    cd = compute_dtype
    w1f = jnp.concatenate([params["w1"], params["w4"]], axis=1)    # [sd+ad, 2H]
    b1f = jnp.concatenate([params["b1"], params["b4"]], axis=1)    # [1, 2H]
    zeros = jnp.zeros((H, 1), jnp.float32)
    w3a = jnp.concatenate([params["w3"], zeros], axis=1)           # [H, 2]
    w3b = jnp.concatenate([zeros, params["w6"]], axis=1)           # [H, 2]
    b3f = jnp.concatenate([params["b3"], params["b6"]], axis=1)    # [1, 2]
    return {
        "w1s": w1f[:state_dim].astype(cd),      # state part of fused layer 1
        "w1a": w1f[state_dim:].astype(cd),      # action part of fused layer 1
        "b1": b1f.astype(jnp.float32),
        "w2": params["w2"].astype(cd),
        "b2": params["b2"].astype(jnp.float32),
        "w5": params["w5"].astype(cd),
        "b5": params["b5"].astype(jnp.float32),
        "w3a": w3a.astype(cd),
        "w3b": w3b.astype(cd),
        "b3": b3f.astype(jnp.float32),
    }


def critic_forward(state, action, fp, *, tile_b=512):
    """Pallas equivalent of Critic.forward(state, action) -> (q1, q2)."""
    B, sd = state.shape
    ad = action.shape[1]
    H = fp["w2"].shape[0]

    # Batch tile: multiple of 8 sublanes, capped (keeps VMEM comfortably under
    # the 32 MiB default scoped limit on v7x even with f32 intermediates).
    tb = min(tile_b, _round_up(max(B, 8), 8))
    Bp = _round_up(B, tb)
    if Bp != B:
        state = jnp.pad(state, ((0, Bp - B), (0, 0)))
        action = jnp.pad(action, ((0, Bp - B), (0, 0)))

    _const = lambda i: (0, 0)   # weights/biases stay VMEM-resident across tiles
    kernel = functools.partial(_critic_kernel, hidden=H)

    q = pl.pallas_call(
        kernel,
        out_shape=jax.ShapeDtypeStruct((Bp, 2), jnp.float32),
        grid=(Bp // tb,),
        in_specs=[
            pl.BlockSpec((tb, sd), lambda i: (i, 0)),       # state tile
            pl.BlockSpec((tb, ad), lambda i: (i, 0)),       # action tile
            pl.BlockSpec(fp["w1s"].shape, _const),
            pl.BlockSpec(fp["w1a"].shape, _const),
            pl.BlockSpec(fp["b1"].shape, _const),
            pl.BlockSpec(fp["w2"].shape, _const),
            pl.BlockSpec(fp["b2"].shape, _const),
            pl.BlockSpec(fp["w5"].shape, _const),
            pl.BlockSpec(fp["b5"].shape, _const),
            pl.BlockSpec(fp["w3a"].shape, _const),
            pl.BlockSpec(fp["w3b"].shape, _const),
            pl.BlockSpec(fp["b3"].shape, _const),
        ],
        out_specs=pl.BlockSpec((tb, 2), lambda i: (i, 0)),
        compiler_params=pltpu.CompilerParams(
            dimension_semantics=("parallel",),              # megacore on v7x
        ),
    )(state, action,
      fp["w1s"], fp["w1a"], fp["b1"],
      fp["w2"], fp["b2"], fp["w5"], fp["b5"],
      fp["w3a"], fp["w3b"], fp["b3"])

    q = q[:B]
    return q[:, 0:1], q[:, 1:2]


def init_critic_params(key, state_dim, action_dim, hidden=256):
    """Deterministic synthetic init, PyTorch-Linear-style uniform(-1/sqrt(fan_in))."""
    dims = [
        ("w1", "b1", state_dim + action_dim, hidden),
        ("w2", "b2", hidden, hidden),
        ("w3", "b3", hidden, 1),
        ("w4", "b4", state_dim + action_dim, hidden),
        ("w5", "b5", hidden, hidden),
        ("w6", "b6", hidden, 1),
    ]
    params = {}
    for wname, bname, fan_in, fan_out in dims:
        key, kw, kb = jax.random.split(key, 3)
        bound = 1.0 / (fan_in ** 0.5)
        # stored as [in, out] so kernel does x @ W + b
        params[wname] = jax.random.uniform(
            kw, (fan_in, fan_out), jnp.float32, -bound, bound)
        params[bname] = jax.random.uniform(
            kb, (1, fan_out), jnp.float32, -bound, bound)
    return params


def _reference_forward(state, action, p):
    sa = jnp.concatenate([state, action], axis=1)
    h = jax.nn.relu(sa @ p["w1"] + p["b1"])
    h = jax.nn.relu(h @ p["w2"] + p["b2"])
    q1 = h @ p["w3"] + p["b3"]
    g = jax.nn.relu(sa @ p["w4"] + p["b4"])
    g = jax.nn.relu(g @ p["w5"] + p["b5"])
    q2 = g @ p["w6"] + p["b6"]
    return q1, q2


if __name__ == "__main__":
    key = jax.random.PRNGKey(0)
    state_dim, action_dim, batch = 8, 4, 2

    kp, ks, ka = jax.random.split(key, 3)
    params = init_critic_params(kp, state_dim, action_dim)
    state = jax.random.normal(ks, (batch, state_dim), jnp.float32)
    action = jax.random.normal(ka, (batch, action_dim), jnp.float32)

    r1, r2 = _reference_forward(state, action, params)

    # f32 compute path: tight check against the pure-JAX reference.
    fp32 = fuse_critic_params(params, state_dim, compute_dtype=jnp.float32)
    q1, q2 = critic_forward(state, action, fp32)
    jax.block_until_ready((q1, q2))
    assert q1.shape == (batch, 1) and q2.shape == (batch, 1)
    assert jnp.allclose(q1, r1, atol=1e-4, rtol=1e-4)
    assert jnp.allclose(q2, r2, atol=1e-4, rtol=1e-4)

    # bf16 matmul path (preferred on v6e/v7x): f32 accumulation, looser check.
    fpbf = fuse_critic_params(params, state_dim, compute_dtype=jnp.bfloat16)
    q1b, q2b = critic_forward(state, action, fpbf)
    jax.block_until_ready((q1b, q2b))
    assert jnp.allclose(q1b, r1, atol=3e-2, rtol=3e-2)
    assert jnp.allclose(q2b, r2, atol=3e-2, rtol=3e-2)

    print("KERNEL_OK")
</pallas_src>

<mosaic_0001>
module attributes {stable_mosaic.version = 11 : i64} {
  func.func @_critic_kernel(%arg0: i32, %arg1: memref<8x8xf32, #tpu.memory_space<vmem>>, %arg2: memref<8x4xf32, #tpu.memory_space<vmem>>, %arg3: memref<8x512xf32, #tpu.memory_space<vmem>>, %arg4: memref<4x512xf32, #tpu.memory_space<vmem>>, %arg5: memref<1x512xf32, #tpu.memory_space<vmem>>, %arg6: memref<256x256xf32, #tpu.memory_space<vmem>>, %arg7: memref<1x256xf32, #tpu.memory_space<vmem>>, %arg8: memref<256x256xf32, #tpu.memory_space<vmem>>, %arg9: memref<1x256xf32, #tpu.memory_space<vmem>>, %arg10: memref<256x2xf32, #tpu.memory_space<vmem>>, %arg11: memref<256x2xf32, #tpu.memory_space<vmem>>, %arg12: memref<1x2xf32, #tpu.memory_space<vmem>>, %arg13: memref<8x2xf32, #tpu.memory_space<vmem>>) attributes {dimension_semantics = [#tpu.dimension_semantics<parallel>], iteration_bounds = array<i64: 1>, scalar_prefetch = 0 : i64, scratch_operands = 0 : i64, tpu.core_type = #tpu.core_type<tc>, window_params = [{transform_indices = @transform_0, window_bounds = array<i64: 8, 8>}, {transform_indices = @transform_1, window_bounds = array<i64: 8, 4>}, {pipeline_mode = #tpu.pipeline_mode<synchronous>, transform_indices = @transform_2, window_bounds = array<i64: 8, 512>}, {pipeline_mode = #tpu.pipeline_mode<synchronous>, transform_indices = @transform_3, window_bounds = array<i64: 4, 512>}, {pipeline_mode = #tpu.pipeline_mode<synchronous>, transform_indices = @transform_4, window_bounds = array<i64: 1, 512>}, {pipeline_mode = #tpu.pipeline_mode<synchronous>, transform_indices = @transform_5, window_bounds = array<i64: 256, 256>}, {pipeline_mode = #tpu.pipeline_mode<synchronous>, transform_indices = @transform_6, window_bounds = array<i64: 1, 256>}, {pipeline_mode = #tpu.pipeline_mode<synchronous>, transform_indices = @transform_7, window_bounds = array<i64: 256, 256>}, {pipeline_mode = #tpu.pipeline_mode<synchronous>, transform_indices = @transform_8, window_bounds = array<i64: 1, 256>}, {pipeline_mode = #tpu.pipeline_mode<synchronous>, transform_indices = @transform_9, window_bounds = array<i64: 256, 2>}, {pipeline_mode = #tpu.pipeline_mode<synchronous>, transform_indices = @transform_10, window_bounds = array<i64: 256, 2>}, {pipeline_mode = #tpu.pipeline_mode<synchronous>, transform_indices = @transform_11, window_bounds = array<i64: 1, 2>}, {transform_indices = @transform_12, window_bounds = array<i64: 8, 2>}]} {
    %c0 = arith.constant 0 : index
    %c0_0 = arith.constant 0 : index
    %0 = vector.load %arg1[%c0, %c0_0] : memref<8x8xf32, #tpu.memory_space<vmem>>, vector<8x8xf32>
    %c0_1 = arith.constant 0 : index
    %c0_2 = arith.constant 0 : index
    %1 = vector.load %arg2[%c0_1, %c0_2] : memref<8x4xf32, #tpu.memory_space<vmem>>, vector<8x4xf32>
    %c0_3 = arith.constant 0 : index
    %c0_4 = arith.constant 0 : index
    %2 = vector.load %arg3[%c0_3, %c0_4] : memref<8x512xf32, #tpu.memory_space<vmem>>, vector<8x512xf32>
    %cst = arith.constant dense<0.000000e+00> : vector<8x512xf32>
    %3 = tpu.matmul %0, %2, %cst {dimension_numbers = #tpu.dot_dimension_numbers<[1], [0], [0], [1], [0, 0, 1, 1], [], []>} : vector<8x8xf32>, vector<8x512xf32>, vector<8x512xf32> -> vector<8x512xf32>
    %c0_5 = arith.constant 0 : index
    %c0_6 = arith.constant 0 : index
    %4 = vector.load %arg4[%c0_5, %c0_6] : memref<4x512xf32, #tpu.memory_space<vmem>>, vector<4x512xf32>
    %cst_7 = arith.constant dense<0.000000e+00> : vector<8x512xf32>
    %5 = tpu.matmul %1, %4, %cst_7 {dimension_numbers = #tpu.dot_dimension_numbers<[1], [0], [0], [1], [0, 0, 1, 1], [], []>} : vector<8x4xf32>, vector<4x512xf32>, vector<8x512xf32> -> vector<8x512xf32>
    %6 = arith.addf %3, %5 : vector<8x512xf32>
    %c0_8 = arith.constant 0 : index
    %c0_9 = arith.constant 0 : index
    %7 = vector.load %arg5[%c0_8, %c0_9] : memref<1x512xf32, #tpu.memory_space<vmem>>, vector<1x512xf32>
    %8 = vector.broadcast %7 : vector<1x512xf32> to vector<8x512xf32>
    %9 = arith.addf %6, %8 : vector<8x512xf32>
    %cst_10 = arith.constant 0.000000e+00 : f32
    %10 = vector.broadcast %cst_10 : f32 to vector<8x512xf32>
    %11 = arith.maximumf %9, %10 : vector<8x512xf32>
    %12 = vector.extract_strided_slice %11 {offsets = [0, 0], sizes = [8, 256], strides = [1, 1]} : vector<8x512xf32> to vector<8x256xf32>
    %13 = vector.extract_strided_slice %11 {offsets = [0, 256], sizes = [8, 256], strides = [1, 1]} : vector<8x512xf32> to vector<8x256xf32>
    %c0_11 = arith.constant 0 : index
    %c0_12 = arith.constant 0 : index
    %14 = vector.load %arg6[%c0_11, %c0_12] : memref<256x256xf32, #tpu.memory_space<vmem>>, vector<256x256xf32>
    %cst_13 = arith.constant dense<0.000000e+00> : vector<8x256xf32>
    %15 = tpu.matmul %12, %14, %cst_13 {dimension_numbers = #tpu.dot_dimension_numbers<[1], [0], [0], [1], [0, 0, 1, 1], [], []>} : vector<8x256xf32>, vector<256x256xf32>, vector<8x256xf32> -> vector<8x256xf32>
    %c0_14 = arith.constant 0 : index
    %c0_15 = arith.constant 0 : index
    %16 = vector.load %arg7[%c0_14, %c0_15] : memref<1x256xf32, #tpu.memory_space<vmem>>, vector<1x256xf32>
    %17 = vector.broadcast %16 : vector<1x256xf32> to vector<8x256xf32>
    %18 = arith.addf %15, %17 : vector<8x256xf32>
    %cst_16 = arith.constant 0.000000e+00 : f32
    %19 = vector.broadcast %cst_16 : f32 to vector<8x256xf32>
    %20 = arith.maximumf %18, %19 : vector<8x256xf32>
    %c0_17 = arith.constant 0 : index
    %c0_18 = arith.constant 0 : index
    %21 = vector.load %arg8[%c0_17, %c0_18] : memref<256x256xf32, #tpu.memory_space<vmem>>, vector<256x256xf32>
    %cst_19 = arith.constant dense<0.000000e+00> : vector<8x256xf32>
    %22 = tpu.matmul %13, %21, %cst_19 {dimension_numbers = #tpu.dot_dimension_numbers<[1], [0], [0], [1], [0, 0, 1, 1], [], []>} : vector<8x256xf32>, vector<256x256xf32>, vector<8x256xf32> -> vector<8x256xf32>
    %c0_20 = arith.constant 0 : index
    %c0_21 = arith.constant 0 : index
    %23 = vector.load %arg9[%c0_20, %c0_21] : memref<1x256xf32, #tpu.memory_space<vmem>>, vector<1x256xf32>
    %24 = vector.broadcast %23 : vector<1x256xf32> to vector<8x256xf32>
    %25 = arith.addf %22, %24 : vector<8x256xf32>
    %cst_22 = arith.constant 0.000000e+00 : f32
    %26 = vector.broadcast %cst_22 : f32 to vector<8x256xf32>
    %27 = arith.maximumf %25, %26 : vector<8x256xf32>
    %c0_23 = arith.constant 0 : index
    %c0_24 = arith.constant 0 : index
    %28 = vector.load %arg10[%c0_23, %c0_24] : memref<256x2xf32, #tpu.memory_space<vmem>>, vector<256x2xf32>
    %cst_25 = arith.constant dense<0.000000e+00> : vector<8x2xf32>
    %29 = tpu.matmul %20, %28, %cst_25 {dimension_numbers = #tpu.dot_dimension_numbers<[1], [0], [0], [1], [0, 0, 1, 1], [], []>} : vector<8x256xf32>, vector<256x2xf32>, vector<8x2xf32> -> vector<8x2xf32>
    %c0_26 = arith.constant 0 : index
    %c0_27 = arith.constant 0 : index
    %30 = vector.load %arg11[%c0_26, %c0_27] : memref<256x2xf32, #tpu.memory_space<vmem>>, vector<256x2xf32>
    %cst_28 = arith.constant dense<0.000000e+00> : vector<8x2xf32>
    %31 = tpu.matmul %27, %30, %cst_28 {dimension_numbers = #tpu.dot_dimension_numbers<[1], [0], [0], [1], [0, 0, 1, 1], [], []>} : vector<8x256xf32>, vector<256x2xf32>, vector<8x2xf32> -> vector<8x2xf32>
    %32 = arith.addf %29, %31 : vector<8x2xf32>
    %c0_29 = arith.constant 0 : index
    %c0_30 = arith.constant 0 : index
    %33 = vector.load %arg12[%c0_29, %c0_30] : memref<1x2xf32, #tpu.memory_space<vmem>>, vector<1x2xf32>
    %34 = vector.broadcast %33 : vector<1x2xf32> to vector<8x2xf32>
    %35 = arith.addf %32, %34 : vector<8x2xf32>
    %c0_31 = arith.constant 0 : index
    %c0_32 = arith.constant 0 : index
    %36 = vector.load %arg13[%c0_31, %c0_32] : memref<8x2xf32, #tpu.memory_space<vmem>>, vector<8x2xf32>
    tpu.vector_store %arg13[%c0_31, %c0_32], %35 {strides = array<i32>} : memref<8x2xf32, #tpu.memory_space<vmem>>, vector<8x2xf32>,
    return
  }
  func.func @transform_0(%arg0: i32) -> (i32, i32) {
    %c0_i32 = arith.constant 0 : i32
    %c0_i32_0 = arith.constant 0 : i32
    return %arg0, %c0_i32 : i32, i32
  }
  func.func @transform_1(%arg0: i32) -> (i32, i32) {
    %c0_i32 = arith.constant 0 : i32
    %c0_i32_0 = arith.constant 0 : i32
    return %arg0, %c0_i32 : i32, i32
  }
  func.func @transform_2(%arg0: i32) -> (i32, i32) {
    %c0_i32 = arith.constant 0 : i32
    %c0_i32_0 = arith.constant 0 : i32
    %c0_i32_1 = arith.constant 0 : i32
    return %c0_i32, %c0_i32_0 : i32, i32
  }
  func.func @transform_3(%arg0: i32) -> (i32, i32) {
    %c0_i32 = arith.constant 0 : i32
    %c0_i32_0 = arith.constant 0 : i32
    %c0_i32_1 = arith.constant 0 : i32
    return %c0_i32, %c0_i32_0 : i32, i32
  }
  func.func @transform_4(%arg0: i32) -> (i32, i32) {
    %c0_i32 = arith.constant 0 : i32
    %c0_i32_0 = arith.constant 0 : i32
    %c0_i32_1 = arith.constant 0 : i32
    return %c0_i32, %c0_i32_0 : i32, i32
  }
  func.func @transform_5(%arg0: i32) -> (i32, i32) {
    %c0_i32 = arith.constant 0 : i32
    %c0_i32_0 = arith.constant 0 : i32
    %c0_i32_1 = arith.constant 0 : i32
    return %c0_i32, %c0_i32_0 : i32, i32
  }
  func.func @transform_6(%arg0: i32) -> (i32, i32) {
    %c0_i32 = arith.constant 0 : i32
    %c0_i32_0 = arith.constant 0 : i32
    %c0_i32_1 = arith.constant 0 : i32
    return %c0_i32, %c0_i32_0 : i32, i32
  }
  func.func @transform_7(%arg0: i32) -> (i32, i32) {
    %c0_i32 = arith.constant 0 : i32
    %c0_i32_0 = arith.constant 0 : i32
    %c0_i32_1 = arith.constant 0 : i32
    return %c0_i32, %c0_i32_0 : i32, i32
  }
  func.func @transform_8(%arg0: i32) -> (i32, i32) {
    %c0_i32 = arith.constant 0 : i32
    %c0_i32_0 = arith.constant 0 : i32
    %c0_i32_1 = arith.constant 0 : i32
    return %c0_i32, %c0_i32_0 : i32, i32
  }
  func.func @transform_9(%arg0: i32) -> (i32, i32) {
    %c0_i32 = arith.constant 0 : i32
    %c0_i32_0 = arith.constant 0 : i32
    %c0_i32_1 = arith.constant 0 : i32
    return %c0_i32, %c0_i32_0 : i32, i32
  }
  func.func @transform_10(%arg0: i32) -> (i32, i32) {
    %c0_i32 = arith.constant 0 : i32
    %c0_i32_0 = arith.constant 0 : i32
    %c0_i32_1 = arith.constant 0 : i32
    return %c0_i32, %c0_i32_0 : i32, i32
  }
  func.func @transform_11(%arg0: i32) -> (i32, i32) {
    %c0_i32 = arith.constant 0 : i32
    %c0_i32_0 = arith.constant 0 : i32
    %c0_i32_1 = arith.constant 0 : i32
    return %c0_i32, %c0_i32_0 : i32, i32
  }
  func.func @transform_12(%arg0: i32) -> (i32, i32) {
    %c0_i32 = arith.constant 0 : i32
    %c0_i32_0 = arith.constant 0 : i32
    return %arg0, %c0_i32 : i32, i32
  }
}

</mosaic_0001>

<llo_original>
// kernel: tpu_custom_call.1
$region0: #{tpu_custom_call.1}
  #allocation0 [shape = 'u32[]', space=smem, size = 0x4, offset = 0x4, fixed_abs, tag = 'smem constant byte address 0x4 - core index']
  #allocation1 [shape = 'u32[144,128]{1,0:T(1,128)}', space=vmem, size = 0x12000, scoped, tag = 'internal scratch']
  %s0 = inlined_call_operand.vmem [shape: f32[8,8], index: 0, kind: input, shape index: {}]
  %s1 = inlined_call_operand.vmem [shape: f32[8,4], index: 1, kind: input, shape index: {}]
  %s2 = inlined_call_operand.hbm [shape: f32[8,512], index: 2, kind: input, shape index: {}]
  %s3 = inlined_call_operand.vmem [shape: f32[4,512], index: 3, kind: input, shape index: {}]
  %s4 = inlined_call_operand.hbm [shape: f32[1,512], index: 4, kind: input, shape index: {}]
  %s5 = inlined_call_operand.vmem [shape: f32[256,256], index: 5, kind: input, shape index: {}]
  %s6 = inlined_call_operand.vmem [shape: f32[1,256], index: 6, kind: input, shape index: {}]
  %s7 = inlined_call_operand.hbm [shape: f32[256,256], index: 7, kind: input, shape index: {}]
  %s8 = inlined_call_operand.hbm [shape: f32[1,256], index: 8, kind: input, shape index: {}]
  %s9 = inlined_call_operand.vmem [shape: f32[256,2], index: 9, kind: input, shape index: {}]
  %s10 = inlined_call_operand.vmem [shape: f32[256,2], index: 10, kind: input, shape index: {}]
  %s11 = inlined_call_operand.hbm [shape: f32[1,2], index: 11, kind: input, shape index: {}]
  %s12 = inlined_call_operand.vmem [shape: f32[8,2], index: 12, kind: output, shape index: {}]
  %s13 = sld [smem:[#allocation0]]
  $region78: #{tpu_custom_call.1} parent=0
    _
  %s15 = ssub.s32 1, %s13
  %s16 = scalar_select 0, %s15, %s13
  $region1: #{tpu_custom_call.1} parent=0
    #allocation2 [shape = 'u8[16384]{0}', space=vmem, size = 0x4000, scoped, tag = 'input window, operand 2, single buffered']
    #allocation3 [shape = 's32[1]{0}', space=sflag, size = 0x4, scoped, tag = 'scoped memory for tpu_custom_call.1']
    #allocation4 [shape = 'u8[2048]{0}', space=vmem, size = 0x800, scoped, tag = 'input window, operand 4, single buffered']
    #allocation5 [shape = 's32[1]{0}', space=sflag, size = 0x4, scoped, tag = 'scoped memory for tpu_custom_call.1']
    #allocation6 [shape = 'u8[262144]{0}', space=vmem, size = 0x40000, scoped, tag = 'input window, operand 7, single buffered']
    #allocation7 [shape = 'u8[1024]{0}', space=vmem, size = 0x400, scoped, tag = 'input window, operand 8, single buffered']
    #allocation8 [shape = 's32[1]{0}', space=sflag, size = 0x4, scoped, tag = 'scoped memory for tpu_custom_call.1']
    #allocation9 [shape = 'u8[512]{0}', space=vmem, size = 0x400, scoped, tag = 'input window, operand 11, single buffered']
    %17 = vsyncpa [#allocation3], 0
    %18 = vsyncpa [#allocation5], 0
    %19 = vsyncpa [#allocation8], 0
    // Predicated region
    $region2: #{tpu_custom_call.1} parent=1 // pred_check
      _
    $region3: #{tpu_custom_call.1} parent=1 // pred_check_branch
      %21 = sbr.rel (0) target = $region5
    $region4: #{tpu_custom_call.1} parent=1 // pred_region
      _
    $region5: #{tpu_custom_call.1} parent=1 // pred_fallthru
      _
    // Predicated region
    $region6: #{tpu_custom_call.1} parent=1 // pred_check
      _
    $region7: #{tpu_custom_call.1} parent=1 // pred_check_branch
      %23 = sbr.rel (0) target = $region9
    $region8: #{tpu_custom_call.1} parent=1 // pred_region
      _
    $region9: #{tpu_custom_call.1} parent=1 // pred_fallthru
      _
    // Predicated region
    $region10: #{tpu_custom_call.1} parent=1 // pred_check
      _
    $region11: #{tpu_custom_call.1} parent=1 // pred_check_branch
      %25 = sbr.rel (0) target = $region13
    $region12: #{tpu_custom_call.1} parent=1 // pred_region
      %s27 = ssub.s32 512, 512
      %28 = vsyncadd [#allocation3], %s27
      %s30 = sshll.u32 [#allocation2], 4
      %s31 = int_to_ptr.vmem [resolvable:$true] %s30
      %33 = dma.hbm_to_vmem [thread:$0]  %s2, 512, %s31, [#allocation3]
    $region13: #{tpu_custom_call.1} parent=1 // pred_fallthru
      _
    // Predicated region
    $region14: #{tpu_custom_call.1} parent=1 // pred_check
      _
    $region15: #{tpu_custom_call.1} parent=1 // pred_check_branch
      %35 = sbr.rel (0) target = $region17
    $region16: #{tpu_custom_call.1} parent=1 // pred_region
      _
    $region17: #{tpu_custom_call.1} parent=1 // pred_fallthru
      _
    // Predicated region
    $region18: #{tpu_custom_call.1} parent=1 // pred_check
      _
    $region19: #{tpu_custom_call.1} parent=1 // pred_check_branch
      %37 = sbr.rel (0) target = $region21
    $region20: #{tpu_custom_call.1} parent=1 // pred_region
      %s39 = ssub.s32 64, 64
      %40 = vsyncadd [#allocation5], %s39
      %s42 = sshll.u32 [#allocation4], 4
      %s43 = int_to_ptr.vmem [resolvable:$true] %s42
      %45 = dma.hbm_to_vmem [thread:$0]  %s4, 64, %s43, [#allocation5]
    $region21: #{tpu_custom_call.1} parent=1 // pred_fallthru
      _
    // Predicated region
    $region22: #{tpu_custom_call.1} parent=1 // pred_check
      _
    $region23: #{tpu_custom_call.1} parent=1 // pred_check_branch
      %47 = sbr.rel (0) target = $region25
    $region24: #{tpu_custom_call.1} parent=1 // pred_region
      _
    $region25: #{tpu_custom_call.1} parent=1 // pred_fallthru
      _
    // Predicated region
    $region26: #{tpu_custom_call.1} parent=1 // pred_check
      _
    $region27: #{tpu_custom_call.1} parent=1 // pred_check_branch
      %49 = sbr.rel (0) target = $region29
    $region28: #{tpu_custom_call.1} parent=1 // pred_region
      _
    $region29: #{tpu_custom_call.1} parent=1 // pred_fallthru
      _
    // Predicated region
    $region30: #{tpu_custom_call.1} parent=1 // pred_check
      _
    $region31: #{tpu_custom_call.1} parent=1 // pred_check_branch
      %51 = sbr.rel (0) target = $region33
    $region32: #{tpu_custom_call.1} parent=1 // pred_region
      %s53 = ssub.s32 8192, 8192
      %54 = vsyncadd [#allocation5], %s53
      %s55 = sshll.u32 [#allocation6], 4
      %s56 = int_to_ptr.vmem [resolvable:$true] %s55
      %61 = dma.hbm_to_vmem [thread:$0]  %s7, 8192, %s56, [#allocation5], 256, 256, 16
    $region33: #{tpu_custom_call.1} parent=1 // pred_fallthru
      _
    // Predicated region
    $region34: #{tpu_custom_call.1} parent=1 // pred_check
      _
    $region35: #{tpu_custom_call.1} parent=1 // pred_check_branch
      %63 = sbr.rel (0) target = $region37
    $region36: #{tpu_custom_call.1} parent=1 // pred_region
      %s65 = ssub.s32 32, 32
      %66 = vsyncadd [#allocation8], %s65
      %s68 = sshll.u32 [#allocation7], 4
      %s69 = int_to_ptr.vmem [resolvable:$true] %s68
      %71 = dma.hbm_to_vmem [thread:$0]  %s8, 32, %s69, [#allocation8]
    $region37: #{tpu_custom_call.1} parent=1 // pred_fallthru
      _
    // Predicated region
    $region38: #{tpu_custom_call.1} parent=1 // pred_check
      _
    $region39: #{tpu_custom_call.1} parent=1 // pred_check_branch
      %73 = sbr.rel (0) target = $region41
    $region40: #{tpu_custom_call.1} parent=1 // pred_region
      _
    $region41: #{tpu_custom_call.1} parent=1 // pred_fallthru
      _
    // Predicated region
    $region42: #{tpu_custom_call.1} parent=1 // pred_check
      _
    $region43: #{tpu_custom_call.1} parent=1 // pred_check_branch
      %75 = sbr.rel (0) target = $region45
    $region44: #{tpu_custom_call.1} parent=1 // pred_region
      _
    $region45: #{tpu_custom_call.1} parent=1 // pred_fallthru
      _
    // Predicated region
    $region46: #{tpu_custom_call.1} parent=1 // pred_check
      _
    $region47: #{tpu_custom_call.1} parent=1 // pred_check_branch
      %77 = sbr.rel (0) target = $region49
    $region48: #{tpu_custom_call.1} parent=1 // pred_region
      %s79 = ssub.s32 16, 16
      %80 = vsyncadd [#allocation8], %s79
      %s82 = sshll.u32 [#allocation9], 4
      %s83 = int_to_ptr.vmem [resolvable:$true] %s82
      %85 = dma.hbm_to_vmem [thread:$0]  %s11, 16, %s83, [#allocation8]
    $region49: #{tpu_custom_call.1} parent=1 // pred_fallthru
      _
    // Predicated region
    $region50: #{tpu_custom_call.1} parent=1 // pred_check
      _
    $region51: #{tpu_custom_call.1} parent=1 // pred_check_branch
      %87 = sbr.rel (0) target = $region53
    $region52: #{tpu_custom_call.1} parent=1 // pred_region
      %88 = dma.done [#allocation3], 512
    $region53: #{tpu_custom_call.1} parent=1 // pred_fallthru
      _
    // Predicated region
    $region54: #{tpu_custom_call.1} parent=1 // pred_check
      _
    $region55: #{tpu_custom_call.1} parent=1 // pred_check_branch
      %90 = sbr.rel (0) target = $region57
    $region56: #{tpu_custom_call.1} parent=1 // pred_region
      %91 = dma.done [#allocation5], 64
    $region57: #{tpu_custom_call.1} parent=1 // pred_fallthru
      _
    // Predicated region
    $region58: #{tpu_custom_call.1} parent=1 // pred_check
      _
    $region59: #{tpu_custom_call.1} parent=1 // pred_check_branch
      %93 = sbr.rel (0) target = $region61
    $region60: #{tpu_custom_call.1} parent=1 // pred_region
      %94 = dma.done [#allocation5], 8192
    $region61: #{tpu_custom_call.1} parent=1 // pred_fallthru
      _
    // Predicated region
    $region62: #{tpu_custom_call.1} parent=1 // pred_check
      _
    $region63: #{tpu_custom_call.1} parent=1 // pred_check_branch
      %96 = sbr.rel (0) target = $region65
    $region64: #{tpu_custom_call.1} parent=1 // pred_region
      %97 = dma.done [#allocation8], 32
    $region65: #{tpu_custom_call.1} parent=1 // pred_fallthru
      _
    // Predicated region
    $region66: #{tpu_custom_call.1} parent=1 // pred_check
      _
    $region67: #{tpu_custom_call.1} parent=1 // pred_check_branch
      %99 = sbr.rel (0) target = $region69
    $region68: #{tpu_custom_call.1} parent=1 // pred_region
      %100 = dma.done [#allocation8], 16
    $region69: #{tpu_custom_call.1} parent=1 // pred_fallthru
      _
    %v101 = vld [vmem:[%s0] sm:$0xff]
    %v102 = vld [vmem:[%s1] sm:$0xff]
    %v103 = vld [vmem:[#allocation2] sm:$0xff]
    %v104 = vld [vmem:[#allocation2 + $0x8] sm:$0xff]
    %v105 = vld [vmem:[#allocation2 + $0x10] sm:$0xff]
    %v106 = vld [vmem:[#allocation2 + $0x18] sm:$0xff]
    %v107 = vld [vmem:[%s3] sm:$0xff]
    %v108 = vld [vmem:[%s3 + $0x8] sm:$0xff]
    %v111 = vcombine.high %v107, %v107
    %v112 = vcombine.high %v108, %v108
    %vm113 = vcmask 31744
    %v115 = vsel %vm113, %v102, 0
    %vm117 = vcmask 1043456
    %v118 = vsel %vm117, %v107, 0
    %v120 = vsel %vm117, %v111, 0
    %v122 = vsel %vm117, %v108, 0
    %v124 = vsel %vm117, %v112, 0
    %126 = vmatprep.subr.mxu0 0.0
    %127 = vmatpush1.msra.mxu0 0.0
    %128 = vmatprep.subr.mxu0 0.0
    %129 = vmatpush1.msra.mxu0 0.0
    %130 = vmatprep.subr.mxu0 0.0
    %131 = vmatpush1.msra.mxu0 0.0
    %132 = vmatprep.subr.mxu0 0.0
    %133 = vmatpush1.msra.mxu0 0.0
    %134 = vmatprep.subr.mxu0 0.0
    %135 = vmatpush1.msra.mxu0 0.0
    %136 = vmatprep.subr.mxu0 0.0
    %137 = vmatpush1.msra.mxu0 0.0
    %138 = vmatprep.subr.mxu0 0.0
    %139 = vmatpush1.msra.mxu0 0.0
    %140 = vmatprep.subr.mxu0 0.0
    %141 = vmatpush1.msra.mxu0 0.0
    %142 = vmatprep.subr.mxu0 0.0
    %143 = vmatpush1.msra.mxu0 0.0
    %144 = vmatprep.subr.mxu0 0.0
    %145 = vmatpush1.msra.mxu0 0.0
    %146 = vmatprep.subr.mxu0 0.0
    %147 = vmatpush1.msra.mxu0 0.0
    %148 = vmatprep.subr.mxu0 0.0
    %149 = vmatpush1.msra.mxu0 0.0
    %150 = vmatprep.subr.mxu0 0.0
    %151 = vmatpush1.msra.mxu0 0.0
    %152 = vmatprep.subr.mxu0 0.0
    %153 = vmatpush1.msra.mxu0 0.0
    %154 = vmatprep.subr.mxu0 0.0
    %155 = vmatpush1.msra.mxu0 0.0
    %156 = vmatprep.subr.mxu0 %v120
    %157 = vmatpush1.msra.mxu0 %v118
    %158 = vmatprep.subr.mxu0 0.0
    %159 = vmatpush2.msra.mxu0 0.0
    %160 = vmatprep.subr.mxu0 0.0
    %161 = vmatpush2.msra.mxu0 0.0
    %162 = vmatprep.subr.mxu0 0.0
    %163 = vmatpush2.msra.mxu0 0.0
    %164 = vmatprep.subr.mxu0 0.0
    %165 = vmatpush2.msra.mxu0 0.0
    %166 = vmatprep.subr.mxu0 0.0
    %167 = vmatpush2.msra.mxu0 0.0
    %168 = vmatprep.subr.mxu0 0.0
    %169 = vmatpush2.msra.mxu0 0.0
    %170 = vmatprep.subr.mxu0 0.0
    %171 = vmatpush2.msra.mxu0 0.0
    %172 = vmatprep.subr.mxu0 0.0
    %173 = vmatpush2.msra.mxu0 0.0
    %174 = vmatprep.subr.mxu0 0.0
    %175 = vmatpush2.msra.mxu0 0.0
    %176 = vmatprep.subr.mxu0 0.0
    %177 = vmatpush2.msra.mxu0 0.0
    %178 = vmatprep.subr.mxu0 0.0
    %179 = vmatpush2.msra.mxu0 0.0
    %180 = vmatprep.subr.mxu0 0.0
    %181 = vmatpush2.msra.mxu0 0.0
    %182 = vmatprep.subr.mxu0 0.0
    %183 = vmatpush2.msra.mxu0 0.0
    %184 = vmatprep.subr.mxu0 0.0
    %185 = vmatpush2.msra.mxu0 0.0
    %186 = vmatprep.subr.mxu0 0.0
    %187 = vmatpush2.msra.mxu0 0.0
    %188 = vmatprep.subr.mxu0 0.0
    %189 = vmatpush2.msra.mxu0 0.0
    %190 = vmatprep.mubr.f32.mxu0 0.0
    %191 = vmatmul.mubr.f32.gmra.mxu0 %v115
    %v192 = vpop.f32.mrf.mxu0
    %v193 = vadd.f32 0.0, %v192
    %v194 = vpop.f32.mrf.mxu0
    %v195 = vadd.f32 0.0, %v194
    %196 = vdwg.mxu0
    %197 = vmatprep.subr.mxu0 0.0
    %198 = vmatpush1.msra.mxu0 0.0
    %199 = vmatprep.subr.mxu0 0.0
    %200 = vmatpush1.msra.mxu0 0.0
    %201 = vmatprep.subr.mxu0 0.0
    %202 = vmatpush1.msra.mxu0 0.0
    %203 = vmatprep.subr.mxu0 0.0
    %204 = vmatpush1.msra.mxu0 0.0
    %205 = vmatprep.subr.mxu0 0.0
    %206 = vmatpush1.msra.mxu0 0.0
    %207 = vmatprep.subr.mxu0 0.0
    %208 = vmatpush1.msra.mxu0 0.0
    %209 = vmatprep.subr.mxu0 0.0
    %210 = vmatpush1.msra.mxu0 0.0
    %211 = vmatprep.subr.mxu0 0.0
    %212 = vmatpush1.msra.mxu0 0.0
    %213 = vmatprep.subr.mxu0 0.0
    %214 = vmatpush1.msra.mxu0 0.0
    %215 = vmatprep.subr.mxu0 0.0
    %216 = vmatpush1.msra.mxu0 0.0
    %217 = vmatprep.subr.mxu0 0.0
    %218 = vmatpush1.msra.mxu0 0.0
    %219 = vmatprep.subr.mxu0 0.0
    %220 = vmatpush1.msra.mxu0 0.0
    %221 = vmatprep.subr.mxu0 0.0
    %222 = vmatpush1.msra.mxu0 0.0
    %223 = vmatprep.subr.mxu0 0.0
    %224 = vmatpush1.msra.mxu0 0.0
    %225 = vmatprep.subr.mxu0 0.0
    %226 = vmatpush1.msra.mxu0 0.0
    %227 = vmatprep.subr.mxu0 %v124
    %228 = vmatpush1.msra.mxu0 %v122
    %229 = vmatprep.subr.mxu0 0.0
    %230 = vmatpush2.msra.mxu0 0.0
    %231 = vmatprep.subr.mxu0 0.0
    %232 = vmatpush2.msra.mxu0 0.0
    %233 = vmatprep.subr.mxu0 0.0
    %234 = vmatpush2.msra.mxu0 0.0
    %235 = vmatprep.subr.mxu0 0.0
    %236 = vmatpush2.msra.mxu0 0.0
    %237 = vmatprep.subr.mxu0 0.0
    %238 = vmatpush2.msra.mxu0 0.0
    %239 = vmatprep.subr.mxu0 0.0
    %240 = vmatpush2.msra.mxu0 0.0
    %241 = vmatprep.subr.mxu0 0.0
    %242 = vmatpush2.msra.mxu0 0.0
    %243 = vmatprep.subr.mxu0 0.0
    %244 = vmatpush2.msra.mxu0 0.0
    %245 = vmatprep.subr.mxu0 0.0
    %246 = vmatpush2.msra.mxu0 0.0
    %247 = vmatprep.subr.mxu0 0.0
    %248 = vmatpush2.msra.mxu0 0.0
    %249 = vmatprep.subr.mxu0 0.0
    %250 = vmatpush2.msra.mxu0 0.0
    %251 = vmatprep.subr.mxu0 0.0
    %252 = vmatpush2.msra.mxu0 0.0
    %253 = vmatprep.subr.mxu0 0.0
    %254 = vmatpush2.msra.mxu0 0.0
    %255 = vmatprep.subr.mxu0 0.0
    %256 = vmatpush2.msra.mxu0 0.0
    %257 = vmatprep.subr.mxu0 0.0
    %258 = vmatpush2.msra.mxu0 0.0
    %259 = vmatprep.subr.mxu0 0.0
    %260 = vmatpush2.msra.mxu0 0.0
    %261 = vmatprep.mubr.f32.mxu0 0.0
    %262 = vmatmul.mubr.f32.gmra.mxu0 %v115
    %v263 = vpop.f32.mrf.mxu0
    %v264 = vadd.f32 0.0, %v263
    %v265 = vpop.f32.mrf.mxu0
    %v266 = vadd.f32 0.0, %v265
    %267 = vdwg.mxu0
    %vm268 = vcmask 64512
    %v270 = vsel %vm268, %v101, 0
    %272 = vmatprep.subr.mxu0 0.0
    %273 = vmatpush1.msra.mxu0 0.0
    %274 = vmatprep.subr.mxu0 0.0
    %275 = vmatpush1.msra.mxu0 0.0
    %276 = vmatprep.subr.mxu0 0.0
    %277 = vmatpush1.msra.mxu0 0.0
    %278 = vmatprep.subr.mxu0 0.0
    %279 = vmatpush1.msra.mxu0 0.0
    %280 = vmatprep.subr.mxu0 0.0
    %281 = vmatpush1.msra.mxu0 0.0
    %282 = vmatprep.subr.mxu0 0.0
    %283 = vmatpush1.msra.mxu0 0.0
    %284 = vmatprep.subr.mxu0 0.0
    %285 = vmatpush1.msra.mxu0 0.0
    %286 = vmatprep.subr.mxu0 0.0
    %287 = vmatpush1.msra.mxu0 0.0
    %288 = vmatprep.subr.mxu0 0.0
    %289 = vmatpush1.msra.mxu0 0.0
    %290 = vmatprep.subr.mxu0 0.0
    %291 = vmatpush1.msra.mxu0 0.0
    %292 = vmatprep.subr.mxu0 0.0
    %293 = vmatpush1.msra.mxu0 0.0
    %294 = vmatprep.subr.mxu0 0.0
    %295 = vmatpush1.msra.mxu0 0.0
    %296 = vmatprep.subr.mxu0 0.0
    %297 = vmatpush1.msra.mxu0 0.0
    %298 = vmatprep.subr.mxu0 0.0
    %299 = vmatpush1.msra.mxu0 0.0
    %300 = vmatprep.subr.mxu0 0.0
    %301 = vmatpush1.msra.mxu0 0.0
    %302 = vmatprep.subr.mxu0 %v104
    %303 = vmatpush1.msra.mxu0 %v103
    %304 = vmatprep.subr.mxu0 0.0
    %305 = vmatpush2.msra.mxu0 0.0
    %306 = vmatprep.subr.mxu0 0.0
    %307 = vmatpush2.msra.mxu0 0.0
    %308 = vmatprep.subr.mxu0 0.0
    %309 = vmatpush2.msra.mxu0 0.0
    %310 = vmatprep.subr.mxu0 0.0
    %311 = vmatpush2.msra.mxu0 0.0
    %312 = vmatprep.subr.mxu0 0.0
    %313 = vmatpush2.msra.mxu0 0.0
    %314 = vmatprep.subr.mxu0 0.0
    %315 = vmatpush2.msra.mxu0 0.0
    %316 = vmatprep.subr.mxu0 0.0
    %317 = vmatpush2.msra.mxu0 0.0
    %318 = vmatprep.subr.mxu0 0.0
    %319 = vmatpush2.msra.mxu0 0.0
    %320 = vmatprep.subr.mxu0 0.0
    %321 = vmatpush2.msra.mxu0 0.0
    %322 = vmatprep.subr.mxu0 0.0
    %323 = vmatpush2.msra.mxu0 0.0
    %324 = vmatprep.subr.mxu0 0.0
    %325 = vmatpush2.msra.mxu0 0.0
    %326 = vmatprep.subr.mxu0 0.0
    %327 = vmatpush2.msra.mxu0 0.0
    %328 = vmatprep.subr.mxu0 0.0
    %329 = vmatpush2.msra.mxu0 0.0
    %330 = vmatprep.subr.mxu0 0.0
    %331 = vmatpush2.msra.mxu0 0.0
    %332 = vmatprep.subr.mxu0 0.0
    %333 = vmatpush2.msra.mxu0 0.0
    %334 = vmatprep.subr.mxu0 0.0
    %335 = vmatpush2.msra.mxu0 0.0
    %336 = vmatprep.mubr.f32.mxu0 0.0
    %337 = vmatmul.mubr.f32.gmra.mxu0 %v270
    %v338 = vpop.f32.mrf.mxu0
    %v339 = vadd.f32 %v193, %v338
    %v340 = vpop.f32.mrf.mxu0
    %v341 = vadd.f32 %v195, %v340
    %342 = vdwg.mxu0
    %343 = vmatprep.subr.mxu0 0.0
    %344 = vmatpush1.msra.mxu0 0.0
    %345 = vmatprep.subr.mxu0 0.0
    %346 = vmatpush1.msra.mxu0 0.0
    %347 = vmatprep.subr.mxu0 0.0
    %348 = vmatpush1.msra.mxu0 0.0
    %349 = vmatprep.subr.mxu0 0.0
    %350 = vmatpush1.msra.mxu0 0.0
    %351 = vmatprep.subr.mxu0 0.0
    %352 = vmatpush1.msra.mxu0 0.0
    %353 = vmatprep.subr.mxu0 0.0
    %354 = vmatpush1.msra.mxu0 0.0
    %355 = vmatprep.subr.mxu0 0.0
    %356 = vmatpush1.msra.mxu0 0.0
    %357 = vmatprep.subr.mxu0 0.0
    %358 = vmatpush1.msra.mxu0 0.0
    %359 = vmatprep.subr.mxu0 0.0
    %360 = vmatpush1.msra.mxu0 0.0
    %361 = vmatprep.subr.mxu0 0.0
    %362 = vmatpush1.msra.mxu0 0.0
    %363 = vmatprep.subr.mxu0 0.0
    %364 = vmatpush1.msra.mxu0 0.0
    %365 = vmatprep.subr.mxu0 0.0
    %366 = vmatpush1.msra.mxu0 0.0
    %367 = vmatprep.subr.mxu0 0.0
    %368 = vmatpush1.msra.mxu0 0.0
    %369 = vmatprep.subr.mxu0 0.0
    %370 = vmatpush1.msra.mxu0 0.0
    %371 = vmatprep.subr.mxu0 0.0
    %372 = vmatpush1.msra.mxu0 0.0
    %373 = vmatprep.subr.mxu0 %v106
    %374 = vmatpush1.msra.mxu0 %v105
    %375 = vmatprep.subr.mxu0 0.0
    %376 = vmatpush2.msra.mxu0 0.0
    %377 = vmatprep.subr.mxu0 0.0
    %378 = vmatpush2.msra.mxu0 0.0
    %379 = vmatprep.subr.mxu0 0.0
    %380 = vmatpush2.msra.mxu0 0.0
    %381 = vmatprep.subr.mxu0 0.0
    %382 = vmatpush2.msra.mxu0 0.0
    %383 = vmatprep.subr.mxu0 0.0
    %384 = vmatpush2.msra.mxu0 0.0
    %385 = vmatprep.subr.mxu0 0.0
    %386 = vmatpush2.msra.mxu0 0.0
    %387 = vmatprep.subr.mxu0 0.0
    %388 = vmatpush2.msra.mxu0 0.0
    %389 = vmatprep.subr.mxu0 0.0
    %390 = vmatpush2.msra.mxu0 0.0
    %391 = vmatprep.subr.mxu0 0.0
    %392 = vmatpush2.msra.mxu0 0.0
    %393 = vmatprep.subr.mxu0 0.0
    %394 = vmatpush2.msra.mxu0 0.0
    %395 = vmatprep.subr.mxu0 0.0
    %396 = vmatpush2.msra.mxu0 0.0
    %397 = vmatprep.subr.mxu0 0.0
    %398 = vmatpush2.msra.mxu0 0.0
    %399 = vmatprep.subr.mxu0 0.0
    %400 = vmatpush2.msra.mxu0 0.0
    %401 = vmatprep.subr.mxu0 0.0
    %402 = vmatpush2.msra.mxu0 0.0
    %403 = vmatprep.subr.mxu0 0.0
    %404 = vmatpush2.msra.mxu0 0.0
    %405 = vmatprep.subr.mxu0 0.0
    %406 = vmatpush2.msra.mxu0 0.0
    %407 = vmatprep.mubr.f32.mxu0 0.0
    %408 = vmatmul.mubr.f32.gmra.mxu0 %v270
    %v409 = vpop.f32.mrf.mxu0
    %v410 = vadd.f32 %v264, %v409
    %v411 = vpop.f32.mrf.mxu0
    %v412 = vadd.f32 %v266, %v411
    %413 = vdwg.mxu0
    %v414 = vld [vmem:[#allocation4] sm:$0xf]
    %v416 = vlaneseq
    %v417 = vshrl.u32 %v416, 7
    %v418 = vsub.s32 0, %v417
    %v419 = vrot.slane %v414, %v418
    %v420 = vlaneseq
    %v421 = vshrl.u32 %v420, 7
    %v422 = vsub.s32 1, %v421
    %v423 = vrot.slane %v414, %v422
    %v424 = vlaneseq
    %v425 = vshrl.u32 %v424, 7
    %v426 = vsub.s32 2, %v425
    %v427 = vrot.slane %v414, %v426
    %v428 = vlaneseq
    %v429 = vshrl.u32 %v428, 7
    %v430 = vsub.s32 3, %v429
    %v431 = vrot.slane %v414, %v430
    %v436 = vadd.f32 %v339, %v419
    %v437 = vadd.f32 %v341, %v423
    %v438 = vadd.f32 %v410, %v427
    %v439 = vadd.f32 %v412, %v431
    %v440 = vmax.f32 %v436, 0.0
    %v441 = vmax.f32 %v437, 0.0
    %v442 = vmax.f32 %v438, 0.0
    %v443 = vmax.f32 %v439, 0.0
    %v444 = vld [vmem:[%s5] sm:$0xff]
    %v445 = vld [vmem:[%s5 + $0x8] sm:$0xff]
    %v446 = vld [vmem:[%s5 + $0x10] sm:$0xff]
    %v447 = vld [vmem:[%s5 + $0x18] sm:$0xff]
    %v448 = vld [vmem:[%s5 + $0x20] sm:$0xff]
    %v449 = vld [vmem:[%s5 + $0x28] sm:$0xff]
    %v450 = vld [vmem:[%s5 + $0x30] sm:$0xff]
    %v451 = vld [vmem:[%s5 + $0x38] sm:$0xff]
    %v452 = vld [vmem:[%s5 + $0x40] sm:$0xff]
    %v453 = vld [vmem:[%s5 + $0x48] sm:$0xff]
    %v454 = vld [vmem:[%s5 + $0x50] sm:$0xff]
    %v455 = vld [vmem:[%s5 + $0x58] sm:$0xff]
    %v456 = vld [vmem:[%s5 + $0x60] sm:$0xff]
    %v457 = vld [vmem:[%s5 + $0x68] sm:$0xff]
    %v458 = vld [vmem:[%s5 + $0x70] sm:$0xff]
    %v459 = vld [vmem:[%s5 + $0x78] sm:$0xff]
    %v460 = vld [vmem:[%s5 + $0x80] sm:$0xff]
    %v461 = vld [vmem:[%s5 + $0x88] sm:$0xff]
    %v462 = vld [vmem:[%s5 + $0x90] sm:$0xff]
    %v463 = vld [vmem:[%s5 + $0x98] sm:$0xff]
    %v464 = vld [vmem:[%s5 + $0xa0] sm:$0xff]
    %v465 = vld [vmem:[%s5 + $0xa8] sm:$0xff]
    %v466 = vld [vmem:[%s5 + $0xb0] sm:$0xff]
    %v467 = vld [vmem:[%s5 + $0xb8] sm:$0xff]
    %v468 = vld [vmem:[%s5 + $0xc0] sm:$0xff]
    %v469 = vld [vmem:[%s5 + $0xc8] sm:$0xff]
    %v470 = vld [vmem:[%s5 + $0xd0] sm:$0xff]
    %v471 = vld [vmem:[%s5 + $0xd8] sm:$0xff]
    %v472 = vld [vmem:[%s5 + $0xe0] sm:$0xff]
    %v473 = vld [vmem:[%s5 + $0xe8] sm:$0xff]
    %v474 = vld [vmem:[%s5 + $0xf0] sm:$0xff]
    %v475 = vld [vmem:[%s5 + $0xf8] sm:$0xff]
    %v476 = vld [vmem:[%s5 + $0x100] sm:$0xff]
    %v477 = vld [vmem:[%s5 + $0x108] sm:$0xff]
    %v478 = vld [vmem:[%s5 + $0x110] sm:$0xff]
    %v479 = vld [vmem:[%s5 + $0x118] sm:$0xff]
    %v480 = vld [vmem:[%s5 + $0x120] sm:$0xff]
    %v481 = vld [vmem:[%s5 + $0x128] sm:$0xff]
    %v482 = vld [vmem:[%s5 + $0x130] sm:$0xff]
    %v483 = vld [vmem:[%s5 + $0x138] sm:$0xff]
    %v484 = vld [vmem:[%s5 + $0x140] sm:$0xff]
    %v485 = vld [vmem:[%s5 + $0x148] sm:$0xff]
    %v486 = vld [vmem:[%s5 + $0x150] sm:$0xff]
    %v487 = vld [vmem:[%s5 + $0x158] sm:$0xff]
    %v488 = vld [vmem:[%s5 + $0x160] sm:$0xff]
    %v489 = vld [vmem:[%s5 + $0x168] sm:$0xff]
    %v490 = vld [vmem:[%s5 + $0x170] sm:$0xff]
    %v491 = vld [vmem:[%s5 + $0x178] sm:$0xff]
    %v492 = vld [vmem:[%s5 + $0x180] sm:$0xff]
    %v493 = vld [vmem:[%s5 + $0x188] sm:$0xff]
    %v494 = vld [vmem:[%s5 + $0x190] sm:$0xff]
    %v495 = vld [vmem:[%s5 + $0x198] sm:$0xff]
    %v496 = vld [vmem:[%s5 + $0x1a0] sm:$0xff]
    %v497 = vld [vmem:[%s5 + $0x1a8] sm:$0xff]
    %v498 = vld [vmem:[%s5 + $0x1b0] sm:$0xff]
    %v499 = vld [vmem:[%s5 + $0x1b8] sm:$0xff]
    %v500 = vld [vmem:[%s5 + $0x1c0] sm:$0xff]
    %v501 = vld [vmem:[%s5 + $0x1c8] sm:$0xff]
    %v502 = vld [vmem:[%s5 + $0x1d0] sm:$0xff]
    %v503 = vld [vmem:[%s5 + $0x1d8] sm:$0xff]
    %v504 = vld [vmem:[%s5 + $0x1e0] sm:$0xff]
    %v505 = vld [vmem:[%s5 + $0x1e8] sm:$0xff]
    %v506 = vld [vmem:[%s5 + $0x1f0] sm:$0xff]
    %v507 = vld [vmem:[%s5 + $0x1f8] sm:$0xff]
    %v508 = vld [vmem:[%s6] sm:$0x3]
    %v510 = vlaneseq
    %v511 = vshrl.u32 %v510, 7
    %v512 = vsub.s32 0, %v511
    %v513 = vrot.slane %v508, %v512
    %v514 = vlaneseq
    %v515 = vshrl.u32 %v514, 7
    %v516 = vsub.s32 1, %v515
    %v517 = vrot.slane %v508, %v516
    %520 = vmatprep.subr.mxu0 %v475
    %521 = vmatpush1.msra.mxu0 %v474
    %522 = vmatprep.subr.mxu0 %v473
    %523 = vmatpush1.msra.mxu0 %v472
    %524 = vmatprep.subr.mxu0 %v471
    %525 = vmatpush1.msra.mxu0 %v470
    %526 = vmatprep.subr.mxu0 %v469
    %527 = vmatpush1.msra.mxu0 %v468
    %528 = vmatprep.subr.mxu0 %v467
    %529 = vmatpush1.msra.mxu0 %v466
    %530 = vmatprep.subr.mxu0 %v465
    %531 = vmatpush1.msra.mxu0 %v464
    %532 = vmatprep.subr.mxu0 %v463
    %533 = vmatpush1.msra.mxu0 %v462
    %534 = vmatprep.subr.mxu0 %v461
    %535 = vmatpush1.msra.mxu0 %v460
    %536 = vmatprep.subr.mxu0 %v459
    %537 = vmatpush1.msra.mxu0 %v458
    %538 = vmatprep.subr.mxu0 %v457
    %539 = vmatpush1.msra.mxu0 %v456
    %540 = vmatprep.subr.mxu0 %v455
    %541 = vmatpush1.msra.mxu0 %v454
    %542 = vmatprep.subr.mxu0 %v453
    %543 = vmatpush1.msra.mxu0 %v452
    %544 = vmatprep.subr.mxu0 %v451
    %545 = vmatpush1.msra.mxu0 %v450
    %546 = vmatprep.subr.mxu0 %v449
    %547 = vmatpush1.msra.mxu0 %v448
    %548 = vmatprep.subr.mxu0 %v447
    %549 = vmatpush1.msra.mxu0 %v446
    %550 = vmatprep.subr.mxu0 %v445
    %551 = vmatpush1.msra.mxu0 %v444
    %552 = vmatprep.subr.mxu0 %v507
    %553 = vmatpush2.msra.mxu0 %v506
    %554 = vmatprep.subr.mxu0 %v505
    %555 = vmatpush2.msra.mxu0 %v504
    %556 = vmatprep.subr.mxu0 %v503
    %557 = vmatpush2.msra.mxu0 %v502
    %558 = vmatprep.subr.mxu0 %v501
    %559 = vmatpush2.msra.mxu0 %v500
    %560 = vmatprep.subr.mxu0 %v499
    %561 = vmatpush2.msra.mxu0 %v498
    %562 = vmatprep.subr.mxu0 %v497
    %563 = vmatpush2.msra.mxu0 %v496
    %564 = vmatprep.subr.mxu0 %v495
    %565 = vmatpush2.msra.mxu0 %v494
    %566 = vmatprep.subr.mxu0 %v493
    %567 = vmatpush2.msra.mxu0 %v492
    %568 = vmatprep.subr.mxu0 %v491
    %569 = vmatpush2.msra.mxu0 %v490
    %570 = vmatprep.subr.mxu0 %v489
    %571 = vmatpush2.msra.mxu0 %v488
    %572 = vmatprep.subr.mxu0 %v487
    %573 = vmatpush2.msra.mxu0 %v486
    %574 = vmatprep.subr.mxu0 %v485
    %575 = vmatpush2.msra.mxu0 %v484
    %576 = vmatprep.subr.mxu0 %v483
    %577 = vmatpush2.msra.mxu0 %v482
    %578 = vmatprep.subr.mxu0 %v481
    %579 = vmatpush2.msra.mxu0 %v480
    %580 = vmatprep.subr.mxu0 %v479
    %581 = vmatpush2.msra.mxu0 %v478
    %582 = vmatprep.subr.mxu0 %v477
    %583 = vmatpush2.msra.mxu0 %v476
    %584 = vmatprep.mubr.f32.mxu0 %v441
    %585 = vmatmul.mubr.f32.gmra.mxu0 %v440
    %v586 = vpop.f32.mrf.mxu0
    %v587 = vadd.f32 %v513, %v586
    %v588 = vpop.f32.mrf.mxu0
    %v589 = vadd.f32 %v517, %v588
    %590 = vdwg.mxu0
    %v591 = vmax.f32 %v587, 0.0
    %v592 = vmax.f32 %v589, 0.0
    %v593 = vld [vmem:[#allocation6] sm:$0xff]
    %v594 = vld [vmem:[#allocation6 + $0x8] sm:$0xff]
    %v595 = vld [vmem:[#allocation6 + $0x10] sm:$0xff]
    %v596 = vld [vmem:[#allocation6 + $0x18] sm:$0xff]
    %v597 = vld [vmem:[#allocation6 + $0x20] sm:$0xff]
    %v598 = vld [vmem:[#allocation6 + $0x28] sm:$0xff]
    %v599 = vld [vmem:[#allocation6 + $0x30] sm:$0xff]
    %v600 = vld [vmem:[#allocation6 + $0x38] sm:$0xff]
    %v601 = vld [vmem:[#allocation6 + $0x40] sm:$0xff]
    %v602 = vld [vmem:[#allocation6 + $0x48] sm:$0xff]
    %v603 = vld [vmem:[#allocation6 + $0x50] sm:$0xff]
    %v604 = vld [vmem:[#allocation6 + $0x58] sm:$0xff]
    %v605 = vld [vmem:[#allocation6 + $0x60] sm:$0xff]
    %v606 = vld [vmem:[#allocation6 + $0x68] sm:$0xff]
    %v607 = vld [vmem:[#allocation6 + $0x70] sm:$0xff]
    %v608 = vld [vmem:[#allocation6 + $0x78] sm:$0xff]
    %v609 = vld [vmem:[#allocation6 + $0x80] sm:$0xff]
    %v610 = vld [vmem:[#allocation6 + $0x88] sm:$0xff]
    %v611 = vld [vmem:[#allocation6 + $0x90] sm:$0xff]
    %v612 = vld [vmem:[#allocation6 + $0x98] sm:$0xff]
    %v613 = vld [vmem:[#allocation6 + $0xa0] sm:$0xff]
    %v614 = vld [vmem:[#allocation6 + $0xa8] sm:$0xff]
    %v615 = vld [vmem:[#allocation6 + $0xb0] sm:$0xff]
    %v616 = vld [vmem:[#allocation6 + $0xb8] sm:$0xff]
    %v617 = vld [vmem:[#allocation6 + $0xc0] sm:$0xff]
    %v618 = vld [vmem:[#allocation6 + $0xc8] sm:$0xff]
    %v619 = vld [vmem:[#allocation6 + $0xd0] sm:$0xff]
    %v620 = vld [vmem:[#allocation6 + $0xd8] sm:$0xff]
    %v621 = vld [vmem:[#allocation6 + $0xe0] sm:$0xff]
    %v622 = vld [vmem:[#allocation6 + $0xe8] sm:$0xff]
    %v623 = vld [vmem:[#allocation6 + $0xf0] sm:$0xff]
    %v624 = vld [vmem:[#allocation6 + $0xf8] sm:$0xff]
    %v625 = vld [vmem:[#allocation6 + $0x100] sm:$0xff]
    %v626 = vld [vmem:[#allocation6 + $0x108] sm:$0xff]
    %v627 = vld [vmem:[#allocation6 + $0x110] sm:$0xff]
    %v628 = vld [vmem:[#allocation6 + $0x118] sm:$0xff]
    %v629 = vld [vmem:[#allocation6 + $0x120] sm:$0xff]
    %v630 = vld [vmem:[#allocation6 + $0x128] sm:$0xff]
    %v631 = vld [vmem:[#allocation6 + $0x130] sm:$0xff]
    %v632 = vld [vmem:[#allocation6 + $0x138] sm:$0xff]
    %v633 = vld [vmem:[#allocation6 + $0x140] sm:$0xff]
    %v634 = vld [vmem:[#allocation6 + $0x148] sm:$0xff]
    %v635 = vld [vmem:[#allocation6 + $0x150] sm:$0xff]
    %v636 = vld [vmem:[#allocation6 + $0x158] sm:$0xff]
    %v637 = vld [vmem:[#allocation6 + $0x160] sm:$0xff]
    %v638 = vld [vmem:[#allocation6 + $0x168] sm:$0xff]
    %v639 = vld [vmem:[#allocation6 + $0x170] sm:$0xff]
    %v640 = vld [vmem:[#allocation6 + $0x178] sm:$0xff]
    %v641 = vld [vmem:[#allocation6 + $0x180] sm:$0xff]
    %v642 = vld [vmem:[#allocation6 + $0x188] sm:$0xff]
    %v643 = vld [vmem:[#allocation6 + $0x190] sm:$0xff]
    %v644 = vld [vmem:[#allocation6 + $0x198] sm:$0xff]
    %v645 = vld [vmem:[#allocation6 + $0x1a0] sm:$0xff]
    %v646 = vld [vmem:[#allocation6 + $0x1a8] sm:$0xff]
    %v647 = vld [vmem:[#allocation6 + $0x1b0] sm:$0xff]
    %v648 = vld [vmem:[#allocation6 + $0x1b8] sm:$0xff]
    %v649 = vld [vmem:[#allocation6 + $0x1c0] sm:$0xff]
    %v650 = vld [vmem:[#allocation6 + $0x1c8] sm:$0xff]
    %v651 = vld [vmem:[#allocation6 + $0x1d0] sm:$0xff]
    %v652 = vld [vmem:[#allocation6 + $0x1d8] sm:$0xff]
    %v653 = vld [vmem:[#allocation6 + $0x1e0] sm:$0xff]
    %v654 = vld [vmem:[#allocation6 + $0x1e8] sm:$0xff]
    %v655 = vld [vmem:[#allocation6 + $0x1f0] sm:$0xff]
    %v656 = vld [vmem:[#allocation6 + $0x1f8] sm:$0xff]
    %v657 = vld [vmem:[#allocation7] sm:$0x3]
    %v659 = vlaneseq
    %v660 = vshrl.u32 %v659, 7
    %v661 = vsub.s32 0, %v660
    %v662 = vrot.slane %v657, %v661
    %v663 = vlaneseq
    %v664 = vshrl.u32 %v663, 7
    %v665 = vsub.s32 1, %v664
    %v666 = vrot.slane %v657, %v665
    %669 = vmatprep.subr.mxu0 %v624
    %670 = vmatpush1.msra.mxu0 %v623
    %671 = vmatprep.subr.mxu0 %v622
    %672 = vmatpush1.msra.mxu0 %v621
    %673 = vmatprep.subr.mxu0 %v620
    %674 = vmatpush1.msra.mxu0 %v619
    %675 = vmatprep.subr.mxu0 %v618
    %676 = vmatpush1.msra.mxu0 %v617
    %677 = vmatprep.subr.mxu0 %v616
    %678 = vmatpush1.msra.mxu0 %v615
    %679 = vmatprep.subr.mxu0 %v614
    %680 = vmatpush1.msra.mxu0 %v613
    %681 = vmatprep.subr.mxu0 %v612
    %682 = vmatpush1.msra.mxu0 %v611
    %683 = vmatprep.subr.mxu0 %v610
    %684 = vmatpush1.msra.mxu0 %v609
    %685 = vmatprep.subr.mxu0 %v608
    %686 = vmatpush1.msra.mxu0 %v607
    %687 = vmatprep.subr.mxu0 %v606
    %688 = vmatpush1.msra.mxu0 %v605
    %689 = vmatprep.subr.mxu0 %v604
    %690 = vmatpush1.msra.mxu0 %v603
    %691 = vmatprep.subr.mxu0 %v602
    %692 = vmatpush1.msra.mxu0 %v601
    %693 = vmatprep.subr.mxu0 %v600
    %694 = vmatpush1.msra.mxu0 %v599
    %695 = vmatprep.subr.mxu0 %v598
    %696 = vmatpush1.msra.mxu0 %v597
    %697 = vmatprep.subr.mxu0 %v596
    %698 = vmatpush1.msra.mxu0 %v595
    %699 = vmatprep.subr.mxu0 %v594
    %700 = vmatpush1.msra.mxu0 %v593
    %701 = vmatprep.subr.mxu0 %v656
    %702 = vmatpush2.msra.mxu0 %v655
    %703 = vmatprep.subr.mxu0 %v654
    %704 = vmatpush2.msra.mxu0 %v653
    %705 = vmatprep.subr.mxu0 %v652
    %706 = vmatpush2.msra.mxu0 %v651
    %707 = vmatprep.subr.mxu0 %v650
    %708 = vmatpush2.msra.mxu0 %v649
    %709 = vmatprep.subr.mxu0 %v648
    %710 = vmatpush2.msra.mxu0 %v647
    %711 = vmatprep.subr.mxu0 %v646
    %712 = vmatpush2.msra.mxu0 %v645
    %713 = vmatprep.subr.mxu0 %v644
    %714 = vmatpush2.msra.mxu0 %v643
    %715 = vmatprep.subr.mxu0 %v642
    %716 = vmatpush2.msra.mxu0 %v641
    %717 = vmatprep.subr.mxu0 %v640
    %718 = vmatpush2.msra.mxu0 %v639
    %719 = vmatprep.subr.mxu0 %v638
    %720 = vmatpush2.msra.mxu0 %v637
    %721 = vmatprep.subr.mxu0 %v636
    %722 = vmatpush2.msra.mxu0 %v635
    %723 = vmatprep.subr.mxu0 %v634
    %724 = vmatpush2.msra.mxu0 %v633
    %725 = vmatprep.subr.mxu0 %v632
    %726 = vmatpush2.msra.mxu0 %v631
    %727 = vmatprep.subr.mxu0 %v630
    %728 = vmatpush2.msra.mxu0 %v629
    %729 = vmatprep.subr.mxu0 %v628
    %730 = vmatpush2.msra.mxu0 %v627
    %731 = vmatprep.subr.mxu0 %v626
    %732 = vmatpush2.msra.mxu0 %v625
    %733 = vmatprep.mubr.f32.mxu0 %v443
    %734 = vmatmul.mubr.f32.gmra.mxu0 %v442
    %v735 = vpop.f32.mrf.mxu0
    %v736 = vadd.f32 %v662, %v735
    %v737 = vpop.f32.mrf.mxu0
    %v738 = vadd.f32 %v666, %v737
    %739 = vdwg.mxu0
    %v740 = vmax.f32 %v736, 0.0
    %v741 = vmax.f32 %v738, 0.0
    %v742 = vld [vmem:[%s9] sm:$0xff]
    %v743 = vld [vmem:[%s9 + $0x8] sm:$0xff]
    %v744 = vld [vmem:[%s9 + $0x10] sm:$0xff]
    %v745 = vld [vmem:[%s9 + $0x18] sm:$0xff]
    %v746 = vld [vmem:[%s9 + $0x20] sm:$0xff]
    %v747 = vld [vmem:[%s9 + $0x28] sm:$0xff]
    %v748 = vld [vmem:[%s9 + $0x30] sm:$0xff]
    %v749 = vld [vmem:[%s9 + $0x38] sm:$0xff]
    %v750 = vld [vmem:[%s9 + $0x40] sm:$0xff]
    %v751 = vld [vmem:[%s9 + $0x48] sm:$0xff]
    %v752 = vld [vmem:[%s9 + $0x50] sm:$0xff]
    %v753 = vld [vmem:[%s9 + $0x58] sm:$0xff]
    %v754 = vld [vmem:[%s9 + $0x60] sm:$0xff]
    %v755 = vld [vmem:[%s9 + $0x68] sm:$0xff]
    %v756 = vld [vmem:[%s9 + $0x70] sm:$0xff]
    %v757 = vld [vmem:[%s9 + $0x78] sm:$0xff]
    %v758 = vld [vmem:[%s9 + $0x80] sm:$0xff]
    %v759 = vld [vmem:[%s9 + $0x88] sm:$0xff]
    %v760 = vld [vmem:[%s9 + $0x90] sm:$0xff]
    %v761 = vld [vmem:[%s9 + $0x98] sm:$0xff]
    %v762 = vld [vmem:[%s9 + $0xa0] sm:$0xff]
    %v763 = vld [vmem:[%s9 + $0xa8] sm:$0xff]
    %v764 = vld [vmem:[%s9 + $0xb0] sm:$0xff]
    %v765 = vld [vmem:[%s9 + $0xb8] sm:$0xff]
    %v766 = vld [vmem:[%s9 + $0xc0] sm:$0xff]
    %v767 = vld [vmem:[%s9 + $0xc8] sm:$0xff]
    %v768 = vld [vmem:[%s9 + $0xd0] sm:$0xff]
    %v769 = vld [vmem:[%s9 + $0xd8] sm:$0xff]
    %v770 = vld [vmem:[%s9 + $0xe0] sm:$0xff]
    %v771 = vld [vmem:[%s9 + $0xe8] sm:$0xff]
    %v772 = vld [vmem:[%s9 + $0xf0] sm:$0xff]
    %v773 = vld [vmem:[%s9 + $0xf8] sm:$0xff]
    %v774 = vld [vmem:[%s10] sm:$0xff]
    %v775 = vld [vmem:[%s10 + $0x8] sm:$0xff]
    %v776 = vld [vmem:[%s10 + $0x10] sm:$0xff]
    %v777 = vld [vmem:[%s10 + $0x18] sm:$0xff]
    %v778 = vld [vmem:[%s10 + $0x20] sm:$0xff]
    %v779 = vld [vmem:[%s10 + $0x28] sm:$0xff]
    %v780 = vld [vmem:[%s10 + $0x30] sm:$0xff]
    %v781 = vld [vmem:[%s10 + $0x38] sm:$0xff]
    %v782 = vld [vmem:[%s10 + $0x40] sm:$0xff]
    %v783 = vld [vmem:[%s10 + $0x48] sm:$0xff]
    %v784 = vld [vmem:[%s10 + $0x50] sm:$0xff]
    %v785 = vld [vmem:[%s10 + $0x58] sm:$0xff]
    %v786 = vld [vmem:[%s10 + $0x60] sm:$0xff]
    %v787 = vld [vmem:[%s10 + $0x68] sm:$0xff]
    %v788 = vld [vmem:[%s10 + $0x70] sm:$0xff]
    %v789 = vld [vmem:[%s10 + $0x78] sm:$0xff]
    %v790 = vld [vmem:[%s10 + $0x80] sm:$0xff]
    %v791 = vld [vmem:[%s10 + $0x88] sm:$0xff]
    %v792 = vld [vmem:[%s10 + $0x90] sm:$0xff]
    %v793 = vld [vmem:[%s10 + $0x98] sm:$0xff]
    %v794 = vld [vmem:[%s10 + $0xa0] sm:$0xff]
    %v795 = vld [vmem:[%s10 + $0xa8] sm:$0xff]
    %v796 = vld [vmem:[%s10 + $0xb0] sm:$0xff]
    %v797 = vld [vmem:[%s10 + $0xb8] sm:$0xff]
    %v798 = vld [vmem:[%s10 + $0xc0] sm:$0xff]
    %v799 = vld [vmem:[%s10 + $0xc8] sm:$0xff]
    %v800 = vld [vmem:[%s10 + $0xd0] sm:$0xff]
    %v801 = vld [vmem:[%s10 + $0xd8] sm:$0xff]
    %v802 = vld [vmem:[%s10 + $0xe0] sm:$0xff]
    %v803 = vld [vmem:[%s10 + $0xe8] sm:$0xff]
    %v804 = vld [vmem:[%s10 + $0xf0] sm:$0xff]
    %v805 = vld [vmem:[%s10 + $0xf8] sm:$0xff]
    %806 = vmatprep.subr.mxu0 0.0
    %807 = vmatpush1.msra.mxu0 %v789
    %808 = vmatprep.subr.mxu0 0.0
    %809 = vmatpush1.msra.mxu0 %v788
    %810 = vmatprep.subr.mxu0 0.0
    %811 = vmatpush1.msra.mxu0 %v787
    %812 = vmatprep.subr.mxu0 0.0
    %813 = vmatpush1.msra.mxu0 %v786
    %814 = vmatprep.subr.mxu0 0.0
    %815 = vmatpush1.msra.mxu0 %v785
    %816 = vmatprep.subr.mxu0 0.0
    %817 = vmatpush1.msra.mxu0 %v784
    %818 = vmatprep.subr.mxu0 0.0
    %819 = vmatpush1.msra.mxu0 %v783
    %820 = vmatprep.subr.mxu0 0.0
    %821 = vmatpush1.msra.mxu0 %v782
    %822 = vmatprep.subr.mxu0 0.0
    %823 = vmatpush1.msra.mxu0 %v781
    %824 = vmatprep.subr.mxu0 0.0
    %825 = vmatpush1.msra.mxu0 %v780
    %826 = vmatprep.subr.mxu0 0.0
    %827 = vmatpush1.msra.mxu0 %v779
    %828 = vmatprep.subr.mxu0 0.0
    %829 = vmatpush1.msra.mxu0 %v778
    %830 = vmatprep.subr.mxu0 0.0
    %831 = vmatpush1.msra.mxu0 %v777
    %832 = vmatprep.subr.mxu0 0.0
    %833 = vmatpush1.msra.mxu0 %v776
    %834 = vmatprep.subr.mxu0 0.0
    %835 = vmatpush1.msra.mxu0 %v775
    %836 = vmatprep.subr.mxu0 0.0
    %837 = vmatpush1.msra.mxu0 %v774
    %838 = vmatprep.subr.mxu0 0.0
    %839 = vmatpush2.msra.mxu0 %v805
    %840 = vmatprep.subr.mxu0 0.0
    %841 = vmatpush2.msra.mxu0 %v804
    %842 = vmatprep.subr.mxu0 0.0
    %843 = vmatpush2.msra.mxu0 %v803
    %844 = vmatprep.subr.mxu0 0.0
    %845 = vmatpush2.msra.mxu0 %v802
    %846 = vmatprep.subr.mxu0 0.0
    %847 = vmatpush2.msra.mxu0 %v801
    %848 = vmatprep.subr.mxu0 0.0
    %849 = vmatpush2.msra.mxu0 %v800
    %850 = vmatprep.subr.mxu0 0.0
    %851 = vmatpush2.msra.mxu0 %v799
    %852 = vmatprep.subr.mxu0 0.0
    %853 = vmatpush2.msra.mxu0 %v798
    %854 = vmatprep.subr.mxu0 0.0
    %855 = vmatpush2.msra.mxu0 %v797
    %856 = vmatprep.subr.mxu0 0.0
    %857 = vmatpush2.msra.mxu0 %v796
    %858 = vmatprep.subr.mxu0 0.0
    %859 = vmatpush2.msra.mxu0 %v795
    %860 = vmatprep.subr.mxu0 0.0
    %861 = vmatpush2.msra.mxu0 %v794
    %862 = vmatprep.subr.mxu0 0.0
    %863 = vmatpush2.msra.mxu0 %v793
    %864 = vmatprep.subr.mxu0 0.0
    %865 = vmatpush2.msra.mxu0 %v792
    %866 = vmatprep.subr.mxu0 0.0
    %867 = vmatpush2.msra.mxu0 %v791
    %868 = vmatprep.subr.mxu0 0.0
    %869 = vmatpush2.msra.mxu0 %v790
    %870 = vmatprep.mubr.f32.mxu0 %v741
    %871 = vmatmul.mubr.f32.gmra.mxu0 %v740
    %v872 = vpop.f32.mrf.mxu0
    %v873 = vadd.f32 0.0, %v872
    %v874 = vpop.f32.mrf.mxu0
    %875 = vdwg.mxu0
    %876 = vmatprep.subr.mxu0 0.0
    %877 = vmatpush1.msra.mxu0 %v757
    %878 = vmatprep.subr.mxu0 0.0
    %879 = vmatpush1.msra.mxu0 %v756
    %880 = vmatprep.subr.mxu0 0.0
    %881 = vmatpush1.msra.mxu0 %v755
    %882 = vmatprep.subr.mxu0 0.0
    %883 = vmatpush1.msra.mxu0 %v754
    %884 = vmatprep.subr.mxu0 0.0
    %885 = vmatpush1.msra.mxu0 %v753
    %886 = vmatprep.subr.mxu0 0.0
    %887 = vmatpush1.msra.mxu0 %v752
    %888 = vmatprep.subr.mxu0 0.0
    %889 = vmatpush1.msra.mxu0 %v751
    %890 = vmatprep.subr.mxu0 0.0
    %891 = vmatpush1.msra.mxu0 %v750
    %892 = vmatprep.subr.mxu0 0.0
    %893 = vmatpush1.msra.mxu0 %v749
    %894 = vmatprep.subr.mxu0 0.0
    %895 = vmatpush1.msra.mxu0 %v748
    %896 = vmatprep.subr.mxu0 0.0
    %897 = vmatpush1.msra.mxu0 %v747
    %898 = vmatprep.subr.mxu0 0.0
    %899 = vmatpush1.msra.mxu0 %v746
    %900 = vmatprep.subr.mxu0 0.0
    %901 = vmatpush1.msra.mxu0 %v745
    %902 = vmatprep.subr.mxu0 0.0
    %903 = vmatpush1.msra.mxu0 %v744
    %904 = vmatprep.subr.mxu0 0.0
    %905 = vmatpush1.msra.mxu0 %v743
    %906 = vmatprep.subr.mxu0 0.0
    %907 = vmatpush1.msra.mxu0 %v742
    %908 = vmatprep.subr.mxu0 0.0
    %909 = vmatpush2.msra.mxu0 %v773
    %910 = vmatprep.subr.mxu0 0.0
    %911 = vmatpush2.msra.mxu0 %v772
    %912 = vmatprep.subr.mxu0 0.0
    %913 = vmatpush2.msra.mxu0 %v771
    %914 = vmatprep.subr.mxu0 0.0
    %915 = vmatpush2.msra.mxu0 %v770
    %916 = vmatprep.subr.mxu0 0.0
    %917 = vmatpush2.msra.mxu0 %v769
    %918 = vmatprep.subr.mxu0 0.0
    %919 = vmatpush2.msra.mxu0 %v768
    %920 = vmatprep.subr.mxu0 0.0
    %921 = vmatpush2.msra.mxu0 %v767
    %922 = vmatprep.subr.mxu0 0.0
    %923 = vmatpush2.msra.mxu0 %v766
    %924 = vmatprep.subr.mxu0 0.0
    %925 = vmatpush2.msra.mxu0 %v765
    %926 = vmatprep.subr.mxu0 0.0
    %927 = vmatpush2.msra.mxu0 %v764
    %928 = vmatprep.subr.mxu0 0.0
    %929 = vmatpush2.msra.mxu0 %v763
    %930 = vmatprep.subr.mxu0 0.0
    %931 = vmatpush2.msra.mxu0 %v762
    %932 = vmatprep.subr.mxu0 0.0
    %933 = vmatpush2.msra.mxu0 %v761
    %934 = vmatprep.subr.mxu0 0.0
    %935 = vmatpush2.msra.mxu0 %v760
    %936 = vmatprep.subr.mxu0 0.0
    %937 = vmatpush2.msra.mxu0 %v759
    %938 = vmatprep.subr.mxu0 0.0
    %939 = vmatpush2.msra.mxu0 %v758
    %940 = vmatprep.mubr.f32.mxu0 %v592
    %941 = vmatmul.mubr.f32.gmra.mxu0 %v591
    %v942 = vpop.f32.mrf.mxu0
    %v943 = vadd.f32 %v873, %v942
    %v944 = vpop.f32.mrf.mxu0
    %945 = vdwg.mxu0
    %v946 = vld [vmem:[#allocation9] sm:$0x1]
    %v948 = vlaneseq
    %v949 = vshrl.u32 %v948, 7
    %v950 = vsub.s32 0, %v949
    %v951 = vrot.slane %v946, %v950
    %v953 = vadd.f32 %v943, %v951
    %vm954 = vcmask 15360
    %955 = vst.msk [vmem:[%s12] sm:$0xff] %vm954, %v953
    // Predicated region
    $region70: #{tpu_custom_call.1} parent=1 // pred_check
      _
    $region71: #{tpu_custom_call.1} parent=1 // pred_check_branch
      %957 = sbr.rel (0) target = $region73
    $region72: #{tpu_custom_call.1} parent=1 // pred_region
      _
    $region73: #{tpu_custom_call.1} parent=1 // pred_fallthru
      _
    // Predicated region
    $region74: #{tpu_custom_call.1} parent=1 // pred_check
      _
    $region75: #{tpu_custom_call.1} parent=1 // pred_check_branch
      %959 = sbr.rel (0) target = $region77
    $region76: #{tpu_custom_call.1} parent=1 // pred_region
      _
    $region77: #{tpu_custom_call.1} parent=1 // pred_fallthru
      _
    %960 = vsyncpa [#allocation3], 1
    %961 = vsyncpa [#allocation5], 1
    %962 = vsyncpa [#allocation8], 1

</llo_original>
